<compile_context>
chip_gen: v5e
topology: v5e:2x2
jax: 0.10.0
libtpu: 0.0.40
codegen_flags: <defaults>
</compile_context>

<pallas_src>
import functools

import jax
import jax.numpy as jnp
from jax import lax
from jax.experimental import pallas as pl
from jax.experimental.pallas import tpu as pltpu


def _layernorm(emb_f32, gamma, beta, eps):
    mean = jnp.mean(emb_f32, axis=-1, keepdims=True)
    centered = emb_f32 - mean
    var = jnp.mean(centered * centered, axis=-1, keepdims=True)
    inv = lax.rsqrt(var + eps)
    return centered * inv * gamma + beta


# --------------------- small-vocab fast path (VMEM-resident table) ---------------------
def _embeddings_vmem_kernel(ids_ref, word_ref, pos_ref, gamma_ref, beta_ref,
                            out_ref, rows_vmem, *, tile_s, seq_len, eps):
    j = pl.program_id(0)            # sequence tile
    b = pl.program_id(1)            # batch row (innermost)
    base = b * seq_len + j * tile_s
    vocab = word_ref.shape[0]

    def gather_one(t):
        tok = jnp.clip(ids_ref[base + t], 0, vocab - 1)
        rows_vmem[pl.ds(t, 1), :] = word_ref[pl.ds(tok, 1), :]

    if tile_s <= 16:                # static trip count -> fully unrolled
        for t in range(tile_s):
            gather_one(t)
    else:
        def body(t, carry):
            gather_one(t)
            return carry
        lax.fori_loop(0, tile_s, body, 0, unroll=8)

    emb = rows_vmem[...].astype(jnp.float32) + pos_ref[...].astype(jnp.float32)
    out = _layernorm(emb, gamma_ref[...], beta_ref[...], eps)
    out_ref[...] = out.astype(out_ref.dtype)     # dropout: identity (inference)


# --------------------- large-vocab path (HBM table, DMA row gather) ---------------------
def _embeddings_hbm_kernel(ids_ref, word_hbm, pos_ref, gamma_ref, beta_ref,
                           out_ref, rows_vmem, row_sems, *, tile_s, seq_len, eps):
    j = pl.program_id(0)            # sequence tile ("parallel")
    b = pl.program_id(1)            # batch row   ("arbitrary" -> sequential per core)
    nb = pl.num_programs(1)
    vocab = word_hbm.shape[0]
    slot = b & 1                    # double-buffer slot for the current batch row

    # rows_vmem is a flat (2*tile_s, H) buffer: slot k occupies rows [k*tile_s, (k+1)*tile_s)

    def issue_tile(batch_idx, slot_idx):
        base = batch_idx * seq_len + j * tile_s

        def issue_one(t):
            tok = jnp.clip(ids_ref[base + t], 0, vocab - 1)
            pltpu.make_async_copy(
                word_hbm.at[pl.ds(tok, 1), :],
                rows_vmem.at[pl.ds(slot_idx * tile_s + t, 1), :],
                row_sems.at[slot_idx],          # all row copies share one semaphore
            ).start()

        if tile_s <= 16:
            for t in range(tile_s):
                issue_one(t)
        else:
            def body(t, carry):
                issue_one(t)
                return carry
            lax.fori_loop(0, tile_s, body, 0, unroll=8)

    # Prime the gather for the first batch row of this sequence tile.  Because the
    # batch axis is "arbitrary" it is never split across cores, so b==0 always runs
    # first on whichever core owns this j.
    @pl.when(b == 0)
    def _():
        issue_tile(0, 0)

    # Prefetch the NEXT batch row's rows into the other slot while we compute.
    @pl.when(b + 1 < nb)
    def _():
        issue_tile(b + 1, 1 - slot)

    # Single aggregated wait: DMA semaphores count bytes, so one wait descriptor sized
    # to the whole tile retires all tile_s row copies issued against this slot.
    cur = pl.ds(pl.multiple_of(slot * tile_s, tile_s), tile_s)
    pltpu.make_async_copy(rows_vmem.at[cur, :], rows_vmem.at[cur, :],
                          row_sems.at[slot]).wait()

    emb = rows_vmem[cur, :].astype(jnp.float32) + pos_ref[...].astype(jnp.float32)
    out = _layernorm(emb, gamma_ref[...], beta_ref[...], eps)
    out_ref[...] = out.astype(out_ref.dtype)     # dropout: identity (inference)


def _pick_tile_s(S):
    # Largest power-of-two tile that divides S; larger tiles amortize the ~0.35us
    # per-grid-step overhead (matters most on v7x).
    for cand in (512, 256, 128, 64, 32, 16, 8):
        if S % cand == 0:
            return cand
    return S


def embeddings_forward(ids, word_table, pos_table, gamma, beta, *,
                       eps=1e-5, tile_s=None, table_dtype=None,
                       force_hbm_gather=False,
                       vmem_table_budget_bytes=4 * 1024 * 1024):
    B, S = ids.shape
    V, H = word_table.shape
    assert pos_table.shape[0] >= S, "sequence longer than the position table"

    if tile_s is None:
        tile_s = _pick_tile_s(S)
    assert S % tile_s == 0, "sequence length must be a multiple of the token tile"
    nst = S // tile_s
    T = B * S

    ids_flat = ids.reshape(T).astype(jnp.int32)          # 1-D -> no SMEM sublane padding
    gamma2d = gamma.reshape(1, H).astype(jnp.float32)
    beta2d = beta.reshape(1, H).astype(jnp.float32)

    use_vmem_table = (not force_hbm_gather) and (V * H * 4 <= vmem_table_budget_bytes)

    if use_vmem_table:
        # Small-vocab fast path: f32 table resident in VMEM; per-row DMA fixed cost
        # would dwarf the data moved, so gather with plain VMEM dynamic row reads.
        word = word_table.astype(jnp.float32)
        pos_s = pos_table[:S].astype(jnp.float32)
        table_bytes = 4
        kernel = functools.partial(_embeddings_vmem_kernel,
                                   tile_s=tile_s, seq_len=S, eps=eps)
        word_spec = pl.BlockSpec((V, H), lambda j, b, ids_ref: (0, 0))
        scratch = [pltpu.VMEM((tile_s, H), jnp.float32)]
    else:
        # Large-vocab path: table stays in HBM, rows gathered by double-buffered DMAs.
        if table_dtype is None:
            table_dtype = word_table.dtype
        word = word_table.astype(table_dtype)
        pos_s = pos_table[:S].astype(table_dtype)
        table_bytes = jnp.dtype(table_dtype).itemsize
        kernel = functools.partial(_embeddings_hbm_kernel,
                                   tile_s=tile_s, seq_len=S, eps=eps)
        word_spec = pl.BlockSpec(memory_space=pl.ANY)     # no auto-DMA of the table
        scratch = [pltpu.VMEM((2 * tile_s, H), word.dtype),   # double-buffered row gather
                   pltpu.SemaphoreType.DMA((2,))]              # one shared sem per slot

    grid_spec = pltpu.PrefetchScalarGridSpec(
        num_scalar_prefetch=1,                 # ids -> SMEM scalars drive the gather
        grid=(nst, B),                         # batch innermost: pos tile reused across b
        in_specs=[
            word_spec,
            pl.BlockSpec((tile_s, H), lambda j, b, ids_ref: (j, 0)),   # position rows
            pl.BlockSpec((1, H), lambda j, b, ids_ref: (0, 0)),        # gamma
            pl.BlockSpec((1, H), lambda j, b, ids_ref: (0, 0)),        # beta
        ],
        out_specs=pl.BlockSpec((tile_s, H),
                               lambda j, b, ids_ref: (b * nst + j, 0)),
        scratch_shapes=scratch,
    )

    # Rough VMEM footprint; raise the scoped limit only when the default would be tight.
    vmem_need = 2 * tile_s * H * (4 + table_bytes) + 2 * tile_s * H * table_bytes
    if use_vmem_table:
        vmem_need += 2 * V * H * 4
    vmem_limit = None
    if vmem_need > 24 * 1024 * 1024:
        vmem_limit = min(int(vmem_need * 2), 100 * 1024 * 1024)

    out_flat = pl.pallas_call(
        kernel,
        out_shape=jax.ShapeDtypeStruct((T, H), jnp.float32),
        grid_spec=grid_spec,
        compiler_params=pltpu.CompilerParams(
            # batch axis must stay "arbitrary": the cross-step gather prefetch assumes
            # sequential b per core (prime at b==0).
            dimension_semantics=("parallel", "arbitrary"),
            vmem_limit_bytes=vmem_limit),
        cost_estimate=pl.CostEstimate(
            flops=10 * T * H,
            transcendentals=T,
            bytes_accessed=(T * 4                       # token ids
                            + T * H * table_bytes       # gathered word rows
                            + S * H * table_bytes       # position rows (read once per tile)
                            + 2 * H * 4                 # gamma / beta
                            + T * H * 4)),              # output
    )(ids_flat, word, pos_s, gamma2d, beta2d)

    return out_flat.reshape(B, S, H)


if __name__ == "__main__":
    # config: vocab_size=32, hidden_dim=32, max positions=512, pad_token_id=0, dropout (eval)
    VOCAB, HIDDEN, MAX_POS = 32, 32, 512
    B, S = 2, 8
    PAD_TOKEN_ID = 0

    key = jax.random.PRNGKey(0)
    k_ids, k_word, k_pos = jax.random.split(key, 3)

    ids = jax.random.randint(k_ids, (B, S), 0, VOCAB, dtype=jnp.int32)

    # nn.Embedding default init ~ N(0, 1); padding_idx row zeroed at init
    word_table = jax.random.normal(k_word, (VOCAB, HIDDEN), dtype=jnp.float32)
    word_table = word_table.at[PAD_TOKEN_ID].set(0.0)
    pos_table = jax.random.normal(k_pos, (MAX_POS, HIDDEN), dtype=jnp.float32)

    # LayerNorm params (PyTorch default: weight=1, bias=0, eps=1e-5)
    gamma = jnp.ones((HIDDEN,), jnp.float32)
    beta = jnp.zeros((HIDDEN,), jnp.float32)

    # plain-JAX reference
    ref = word_table[ids] + pos_table[:S][None, :, :]
    mu = ref.mean(-1, keepdims=True)
    var = ((ref - mu) ** 2).mean(-1, keepdims=True)
    ref = (ref - mu) / jnp.sqrt(var + 1e-5) * gamma + beta

    # 1) small-vocab fast path (word table resident in VMEM)
    out_fast = jax.block_until_ready(
        embeddings_forward(ids, word_table, pos_table, gamma, beta))
    assert out_fast.shape == (B, S, HIDDEN)
    assert jnp.allclose(out_fast, ref, atol=1e-4, rtol=1e-4), "VMEM fast path mismatch"

    # 2) large-vocab path (HBM-resident table, double-buffered row-gather DMAs)
    out_hbm = jax.block_until_ready(
        embeddings_forward(ids, word_table, pos_table, gamma, beta,
                           force_hbm_gather=True))
    assert jnp.allclose(out_hbm, ref, atol=1e-4, rtol=1e-4), "HBM gather path mismatch"

    print("KERNEL_OK")
</pallas_src>

<mosaic_0001>
module attributes {stable_mosaic.version = 11 : i64} {
  func.func @_embeddings_vmem_kernel(%arg0: i32, %arg1: i32, %arg2: memref<16xi32, #tpu.memory_space<smem>>, %arg3: memref<32x32xf32, #tpu.memory_space<vmem>>, %arg4: memref<8x32xf32, #tpu.memory_space<vmem>>, %arg5: memref<1x32xf32, #tpu.memory_space<vmem>>, %arg6: memref<1x32xf32, #tpu.memory_space<vmem>>, %arg7: memref<8x32xf32, #tpu.memory_space<vmem>>, %arg8: memref<8x32xf32, #tpu.memory_space<vmem>>) attributes {dimension_semantics = [#tpu.dimension_semantics<parallel>, #tpu.dimension_semantics<arbitrary>], iteration_bounds = array<i64: 1, 2>, scalar_prefetch = 1 : i64, scratch_operands = 1 : i64, tpu.core_type = #tpu.core_type<tc>, window_params = [{pipeline_mode = #tpu.pipeline_mode<synchronous>, transform_indices = @transform_0, window_bounds = array<i64: 32, 32>}, {transform_indices = @transform_1, window_bounds = array<i64: 8, 32>}, {pipeline_mode = #tpu.pipeline_mode<synchronous>, transform_indices = @transform_2, window_bounds = array<i64: 1, 32>}, {pipeline_mode = #tpu.pipeline_mode<synchronous>, transform_indices = @transform_3, window_bounds = array<i64: 1, 32>}, {transform_indices = @transform_4, window_bounds = array<i64: 8, 32>}]} {
    %c8_i32 = arith.constant 8 : i32
    %0 = arith.muli %arg1, %c8_i32 : i32
    %c8_i32_0 = arith.constant 8 : i32
    %1 = arith.muli %arg0, %c8_i32_0 : i32
    %2 = arith.addi %0, %1 : i32
    %c0_i32 = arith.constant 0 : i32
    %3 = arith.addi %2, %c0_i32 : i32
    %4 = arith.index_cast %3 : i32 to index
    %5 = memref.load %arg2[%4] : memref<16xi32, #tpu.memory_space<smem>>
    %c0_i32_1 = arith.constant 0 : i32
    %c31_i32 = arith.constant 31 : i32
    %6 = arith.maxsi %c0_i32_1, %5 : i32
    %7 = arith.minsi %c31_i32, %6 : i32
    %8 = arith.index_cast %7 : i32 to index
    %c0 = arith.constant 0 : index
    %9 = vector.load %arg3[%8, %c0] : memref<32x32xf32, #tpu.memory_space<vmem>>, vector<1x32xf32>
    %c0_2 = arith.constant 0 : index
    %c0_3 = arith.constant 0 : index
    %10 = vector.load %arg8[%c0_2, %c0_3] : memref<8x32xf32, #tpu.memory_space<vmem>>, vector<1x32xf32>
    tpu.vector_store %arg8[%c0_2, %c0_3], %9 {strides = array<i32>} : memref<8x32xf32, #tpu.memory_space<vmem>>, vector<1x32xf32>,
    %c1_i32 = arith.constant 1 : i32
    %11 = arith.addi %2, %c1_i32 : i32
    %12 = arith.index_cast %11 : i32 to index
    %13 = memref.load %arg2[%12] : memref<16xi32, #tpu.memory_space<smem>>
    %c0_i32_4 = arith.constant 0 : i32
    %c31_i32_5 = arith.constant 31 : i32
    %14 = arith.maxsi %c0_i32_4, %13 : i32
    %15 = arith.minsi %c31_i32_5, %14 : i32
    %16 = arith.index_cast %15 : i32 to index
    %c0_6 = arith.constant 0 : index
    %17 = vector.load %arg3[%16, %c0_6] : memref<32x32xf32, #tpu.memory_space<vmem>>, vector<1x32xf32>
    %c1 = arith.constant 1 : index
    %c0_7 = arith.constant 0 : index
    %18 = vector.load %arg8[%c1, %c0_7] : memref<8x32xf32, #tpu.memory_space<vmem>>, vector<1x32xf32>
    tpu.vector_store %arg8[%c1, %c0_7], %17 {strides = array<i32>} : memref<8x32xf32, #tpu.memory_space<vmem>>, vector<1x32xf32>,
    %c2_i32 = arith.constant 2 : i32
    %19 = arith.addi %2, %c2_i32 : i32
    %20 = arith.index_cast %19 : i32 to index
    %21 = memref.load %arg2[%20] : memref<16xi32, #tpu.memory_space<smem>>
    %c0_i32_8 = arith.constant 0 : i32
    %c31_i32_9 = arith.constant 31 : i32
    %22 = arith.maxsi %c0_i32_8, %21 : i32
    %23 = arith.minsi %c31_i32_9, %22 : i32
    %24 = arith.index_cast %23 : i32 to index
    %c0_10 = arith.constant 0 : index
    %25 = vector.load %arg3[%24, %c0_10] : memref<32x32xf32, #tpu.memory_space<vmem>>, vector<1x32xf32>
    %c2 = arith.constant 2 : index
    %c0_11 = arith.constant 0 : index
    %26 = vector.load %arg8[%c2, %c0_11] : memref<8x32xf32, #tpu.memory_space<vmem>>, vector<1x32xf32>
    tpu.vector_store %arg8[%c2, %c0_11], %25 {strides = array<i32>} : memref<8x32xf32, #tpu.memory_space<vmem>>, vector<1x32xf32>,
    %c3_i32 = arith.constant 3 : i32
    %27 = arith.addi %2, %c3_i32 : i32
    %28 = arith.index_cast %27 : i32 to index
    %29 = memref.load %arg2[%28] : memref<16xi32, #tpu.memory_space<smem>>
    %c0_i32_12 = arith.constant 0 : i32
    %c31_i32_13 = arith.constant 31 : i32
    %30 = arith.maxsi %c0_i32_12, %29 : i32
    %31 = arith.minsi %c31_i32_13, %30 : i32
    %32 = arith.index_cast %31 : i32 to index
    %c0_14 = arith.constant 0 : index
    %33 = vector.load %arg3[%32, %c0_14] : memref<32x32xf32, #tpu.memory_space<vmem>>, vector<1x32xf32>
    %c3 = arith.constant 3 : index
    %c0_15 = arith.constant 0 : index
    %34 = vector.load %arg8[%c3, %c0_15] : memref<8x32xf32, #tpu.memory_space<vmem>>, vector<1x32xf32>
    tpu.vector_store %arg8[%c3, %c0_15], %33 {strides = array<i32>} : memref<8x32xf32, #tpu.memory_space<vmem>>, vector<1x32xf32>,
    %c4_i32 = arith.constant 4 : i32
    %35 = arith.addi %2, %c4_i32 : i32
    %36 = arith.index_cast %35 : i32 to index
    %37 = memref.load %arg2[%36] : memref<16xi32, #tpu.memory_space<smem>>
    %c0_i32_16 = arith.constant 0 : i32
    %c31_i32_17 = arith.constant 31 : i32
    %38 = arith.maxsi %c0_i32_16, %37 : i32
    %39 = arith.minsi %c31_i32_17, %38 : i32
    %40 = arith.index_cast %39 : i32 to index
    %c0_18 = arith.constant 0 : index
    %41 = vector.load %arg3[%40, %c0_18] : memref<32x32xf32, #tpu.memory_space<vmem>>, vector<1x32xf32>
    %c4 = arith.constant 4 : index
    %c0_19 = arith.constant 0 : index
    %42 = vector.load %arg8[%c4, %c0_19] : memref<8x32xf32, #tpu.memory_space<vmem>>, vector<1x32xf32>
    tpu.vector_store %arg8[%c4, %c0_19], %41 {strides = array<i32>} : memref<8x32xf32, #tpu.memory_space<vmem>>, vector<1x32xf32>,
    %c5_i32 = arith.constant 5 : i32
    %43 = arith.addi %2, %c5_i32 : i32
    %44 = arith.index_cast %43 : i32 to index
    %45 = memref.load %arg2[%44] : memref<16xi32, #tpu.memory_space<smem>>
    %c0_i32_20 = arith.constant 0 : i32
    %c31_i32_21 = arith.constant 31 : i32
    %46 = arith.maxsi %c0_i32_20, %45 : i32
    %47 = arith.minsi %c31_i32_21, %46 : i32
    %48 = arith.index_cast %47 : i32 to index
    %c0_22 = arith.constant 0 : index
    %49 = vector.load %arg3[%48, %c0_22] : memref<32x32xf32, #tpu.memory_space<vmem>>, vector<1x32xf32>
    %c5 = arith.constant 5 : index
    %c0_23 = arith.constant 0 : index
    %50 = vector.load %arg8[%c5, %c0_23] : memref<8x32xf32, #tpu.memory_space<vmem>>, vector<1x32xf32>
    tpu.vector_store %arg8[%c5, %c0_23], %49 {strides = array<i32>} : memref<8x32xf32, #tpu.memory_space<vmem>>, vector<1x32xf32>,
    %c6_i32 = arith.constant 6 : i32
    %51 = arith.addi %2, %c6_i32 : i32
    %52 = arith.index_cast %51 : i32 to index
    %53 = memref.load %arg2[%52] : memref<16xi32, #tpu.memory_space<smem>>
    %c0_i32_24 = arith.constant 0 : i32
    %c31_i32_25 = arith.constant 31 : i32
    %54 = arith.maxsi %c0_i32_24, %53 : i32
    %55 = arith.minsi %c31_i32_25, %54 : i32
    %56 = arith.index_cast %55 : i32 to index
    %c0_26 = arith.constant 0 : index
    %57 = vector.load %arg3[%56, %c0_26] : memref<32x32xf32, #tpu.memory_space<vmem>>, vector<1x32xf32>
    %c6 = arith.constant 6 : index
    %c0_27 = arith.constant 0 : index
    %58 = vector.load %arg8[%c6, %c0_27] : memref<8x32xf32, #tpu.memory_space<vmem>>, vector<1x32xf32>
    tpu.vector_store %arg8[%c6, %c0_27], %57 {strides = array<i32>} : memref<8x32xf32, #tpu.memory_space<vmem>>, vector<1x32xf32>,
    %c7_i32 = arith.constant 7 : i32
    %59 = arith.addi %2, %c7_i32 : i32
    %60 = arith.index_cast %59 : i32 to index
    %61 = memref.load %arg2[%60] : memref<16xi32, #tpu.memory_space<smem>>
    %c0_i32_28 = arith.constant 0 : i32
    %c31_i32_29 = arith.constant 31 : i32
    %62 = arith.maxsi %c0_i32_28, %61 : i32
    %63 = arith.minsi %c31_i32_29, %62 : i32
    %64 = arith.index_cast %63 : i32 to index
    %c0_30 = arith.constant 0 : index
    %65 = vector.load %arg3[%64, %c0_30] : memref<32x32xf32, #tpu.memory_space<vmem>>, vector<1x32xf32>
    %c7 = arith.constant 7 : index
    %c0_31 = arith.constant 0 : index
    %66 = vector.load %arg8[%c7, %c0_31] : memref<8x32xf32, #tpu.memory_space<vmem>>, vector<1x32xf32>
    tpu.vector_store %arg8[%c7, %c0_31], %65 {strides = array<i32>} : memref<8x32xf32, #tpu.memory_space<vmem>>, vector<1x32xf32>,
    %c0_32 = arith.constant 0 : index
    %c0_33 = arith.constant 0 : index
    %67 = vector.load %arg8[%c0_32, %c0_33] : memref<8x32xf32, #tpu.memory_space<vmem>>, vector<8x32xf32>
    %c0_34 = arith.constant 0 : index
    %c0_35 = arith.constant 0 : index
    %68 = vector.load %arg4[%c0_34, %c0_35] : memref<8x32xf32, #tpu.memory_space<vmem>>, vector<8x32xf32>
    %69 = arith.addf %67, %68 : vector<8x32xf32>
    %c0_36 = arith.constant 0 : index
    %c0_37 = arith.constant 0 : index
    %70 = vector.load %arg5[%c0_36, %c0_37] : memref<1x32xf32, #tpu.memory_space<vmem>>, vector<1x32xf32>
    %c0_38 = arith.constant 0 : index
    %c0_39 = arith.constant 0 : index
    %71 = vector.load %arg6[%c0_38, %c0_39] : memref<1x32xf32, #tpu.memory_space<vmem>>, vector<1x32xf32>
    %cst = arith.constant dense<0.000000e+00> : vector<8xf32>
    %72 = vector.multi_reduction <add>, %69, %cst [1] : vector<8x32xf32> to vector<8xf32>
    %73 = vector.shape_cast %72 : vector<8xf32> to vector<8x1xf32>
    %cst_40 = arith.constant 3.200000e+01 : f32
    %74 = vector.broadcast %cst_40 : f32 to vector<8x1xf32>
    %75 = arith.divf %73, %74 : vector<8x1xf32>
    %76 = vector.broadcast %75 : vector<8x1xf32> to vector<8x32xf32>
    %77 = arith.subf %69, %76 : vector<8x32xf32>
    %78 = arith.mulf %77, %77 : vector<8x32xf32>
    %cst_41 = arith.constant dense<0.000000e+00> : vector<8xf32>
    %79 = vector.multi_reduction <add>, %78, %cst_41 [1] : vector<8x32xf32> to vector<8xf32>
    %80 = vector.shape_cast %79 : vector<8xf32> to vector<8x1xf32>
    %cst_42 = arith.constant 3.200000e+01 : f32
    %81 = vector.broadcast %cst_42 : f32 to vector<8x1xf32>
    %82 = arith.divf %80, %81 : vector<8x1xf32>
    %cst_43 = arith.constant 9.99999974E-6 : f32
    %83 = vector.broadcast %cst_43 : f32 to vector<8x1xf32>
    %84 = arith.addf %82, %83 : vector<8x1xf32>
    %85 = math.rsqrt %84 : vector<8x1xf32>
    %86 = vector.broadcast %85 : vector<8x1xf32> to vector<8x32xf32>
    %87 = arith.mulf %77, %86 : vector<8x32xf32>
    %88 = vector.broadcast %70 : vector<1x32xf32> to vector<8x32xf32>
    %89 = arith.mulf %87, %88 : vector<8x32xf32>
    %90 = vector.broadcast %71 : vector<1x32xf32> to vector<8x32xf32>
    %91 = arith.addf %89, %90 : vector<8x32xf32>
    %c0_44 = arith.constant 0 : index
    %c0_45 = arith.constant 0 : index
    %92 = vector.load %arg7[%c0_44, %c0_45] : memref<8x32xf32, #tpu.memory_space<vmem>>, vector<8x32xf32>
    tpu.vector_store %arg7[%c0_44, %c0_45], %91 {strides = array<i32>} : memref<8x32xf32, #tpu.memory_space<vmem>>, vector<8x32xf32>,
    return
  }
  func.func @transform_0(%arg0: i32, %arg1: i32, %arg2: memref<16xi32, #tpu.memory_space<smem>>) -> (i32, i32) {
    %c0_i32 = arith.constant 0 : i32
    %c0_i32_0 = arith.constant 0 : i32
    %c0_i32_1 = arith.constant 0 : i32
    return %c0_i32, %c0_i32_0 : i32, i32
  }
  func.func @transform_1(%arg0: i32, %arg1: i32, %arg2: memref<16xi32, #tpu.memory_space<smem>>) -> (i32, i32) {
    %c0_i32 = arith.constant 0 : i32
    %c0_i32_0 = arith.constant 0 : i32
    return %arg0, %c0_i32 : i32, i32
  }
  func.func @transform_2(%arg0: i32, %arg1: i32, %arg2: memref<16xi32, #tpu.memory_space<smem>>) -> (i32, i32) {
    %c0_i32 = arith.constant 0 : i32
    %c0_i32_0 = arith.constant 0 : i32
    %c0_i32_1 = arith.constant 0 : i32
    return %c0_i32, %c0_i32_0 : i32, i32
  }
  func.func @transform_3(%arg0: i32, %arg1: i32, %arg2: memref<16xi32, #tpu.memory_space<smem>>) -> (i32, i32) {
    %c0_i32 = arith.constant 0 : i32
    %c0_i32_0 = arith.constant 0 : i32
    %c0_i32_1 = arith.constant 0 : i32
    return %c0_i32, %c0_i32_0 : i32, i32
  }
  func.func @transform_4(%arg0: i32, %arg1: i32, %arg2: memref<16xi32, #tpu.memory_space<smem>>) -> (i32, i32) {
    %c1_i32 = arith.constant 1 : i32
    %0 = arith.muli %arg1, %c1_i32 : i32
    %1 = arith.addi %0, %arg0 : i32
    %c0_i32 = arith.constant 0 : i32
    %c0_i32_0 = arith.constant 0 : i32
    return %1, %c0_i32 : i32, i32
  }
}

</mosaic_0001>

<llo_original>
// kernel: tpu_custom_call.1
$region0: #{tpu_custom_call.1}
  #allocation0 [shape = 'u32[]', space=smem, size = 0x4, offset = 0x4, fixed_abs, tag = 'smem constant byte address 0x4 - core index']
  #allocation1 [shape = 'u32[72,128]{1,0:T(1,128)}', space=vmem, size = 0x9000, scoped, tag = 'internal scratch']
  #allocation2 [shape = 'f32[8,32]{1,0:T(8,128)}', space=vmem, size = 0x1000, scoped, tag = 'scratch operand']
  #allocation3 [shape = 's32[1]{0}', space=sflag, size = 0x4, scoped, tag = 'scoped memory for tpu_custom_call.1']
  #allocation4 [shape = 'u8[512]{0}', space=smem, size = 0x200, scoped, tag = 'prefetched SMEM operand 0']
  %s0 = inlined_call_operand.hbm [shape: s32[16], index: 0, kind: input, shape index: {}]
  %s1 = inlined_call_operand.hbm [shape: f32[32,32], index: 1, kind: input, shape index: {}]
  %s2 = inlined_call_operand.hbm [shape: f32[8,32], index: 2, kind: input, shape index: {}]
  %s3 = inlined_call_operand.vmem [shape: f32[1,32], index: 3, kind: input, shape index: {}]
  %s4 = inlined_call_operand.vmem [shape: f32[1,32], index: 4, kind: input, shape index: {}]
  %s5 = inlined_call_operand.hbm [shape: f32[16,32], index: 5, kind: output, shape index: {}]
  %s6 = sld [smem:[#allocation0]]
  $region57: #{tpu_custom_call.1} parent=0
    _
  %s8 = ssub.s32 1, %s6
  %s9 = scalar_select 0, %s8, %s6
  %s11 = sshll.u32 %s0, 4
  %s12 = int_to_ptr.hbm [resolvable:$true] %s11
  %14 = dma.hbm_to_smem %s12, 16, [#allocation4], [#allocation3]
  %16 = dma.done [#allocation3], 16
  %17 = sfence
  $region1: #{tpu_custom_call.1} parent=0
    #allocation5 [shape = 'u8[16384]{0}', space=vmem, size = 0x4000, scoped, tag = 'input window, operand 1, single buffered']
    #allocation6 [shape = 's32[2]{0}', space=sflag, size = 0x8, scoped, tag = 'scoped memory for tpu_custom_call.1']
    #allocation7 [shape = 's32[2]{0}', space=sflag, size = 0x8, scoped, tag = 'scoped memory for tpu_custom_call.1']
    #allocation8 [shape = 'u8[4096]{0}', space=vmem, size = 0x1000, scoped, tag = 'input window, operand 2, single buffered']
    #allocation9 [shape = 's32[1]{0}', space=sflag, size = 0x4, scoped, tag = 'scoped memory for tpu_custom_call.1']
    #allocation10 [shape = 'u8[8192]{0}', space=vmem, size = 0x2000, scoped, tag = 'output window, operand 0']
    %18 = vsyncpa [#allocation6], 0
    %19 = vsyncpa [#allocation9], 0
    %20 = vsyncpa [#allocation7], 0
    %s21 = scalar_lea.sflag [#allocation7], 1
    %22 = vsyncpa %s21, 0
    loop: start=0, step=1, limit=4
    $region2: #{tpu_custom_call.1} parent=1 // loop_pre_header
      _
    $region3: #{tpu_custom_call.1} parent=1 // loop_header
      %s24 = sphi 0, %s28
      %p25 = scmp.ge.s32.totalorder %s24, 4
      %s31 = sphi 0, %s43
      %s32 = sphi 0, %s39
      %s33 = sphi 0, %s31
      %s34 = sphi 0, %s32
      %s35 = sphi 0, %s33
      %s36 = sphi 0, %s34
      %s44 = sphi 0, %s44
      %s46 = sphi 0, %s44
      %s47 = sphi 0, %s46
      %s61 = sphi 0, %s47
      %s67 = sphi 0, %s69
      %s70 = sphi 0, %s67
      %s71 = sphi 0, %s70
      %s87 = sphi 0, %s71
      %s91 = sphi 0, %s91
      %s93 = sphi 0, %s91
      %s94 = sphi 0, %s93
      %s108 = sphi 0, %s94
      %s112 = sphi 0, %s112
      %s114 = sphi 0, %s112
      %s115 = sphi 0, %s114
      %s129 = sphi 0, %s115
      %s137 = sphi 0, %s139
      %s140 = sphi 0, %s137
      %s141 = sphi 0, %s140
      %s157 = sphi 0, %s141
    $region4: #{tpu_custom_call.1} parent=1 // loop_header_branch
      %27 = sbr.rel (%p25) target = $region8
    $region5: #{tpu_custom_call.1} parent=1 // loop_body
      %s29 = ssub.s32 %s24, 1
      %s30 = ssub.s32 %s24, 2
      %s37 = sadd.s32 1, %s32
      %p38 = scmp.ge.s32.totalorder %s37, 2
      %s39 = scalar_select %p38, 0, %s37
      %s40 = sadd.s32 1, %s31
      %s41 = scalar_select %p38, %s40, %s31
      %p42 = scmp.ge.s32.totalorder %s41, 1
      %s43 = scalar_select %p42, 0, %s41
      %s45 = sadd.s32 %s44, 1
      %p48 = scmp.eq.s32.totalorder %s24, 1
      %p49 = scmp.ne.s32.totalorder %s44, %s46
      %p50 = scmp.eq.s32.totalorder %s24, 0
      %p51 = por %p49, %p50
      %p52 = scmp.ne.s32.totalorder %s44, %s46
      %p53 = scmp.eq.s32.totalorder %s29, 1
      %p54 = por %p52, %p53
      %p55 = scmp.ne.s32.totalorder %s46, %s47
      %p56 = scmp.eq.s32.totalorder %s29, 0
      %p57 = por %p55, %p56
      %p58 = scmp.ne.s32.totalorder %s46, %s47
      %p59 = scmp.eq.s32.totalorder %s30, 1
      %p60 = por %p58, %p59
      %p62 = scmp.ne.s32.totalorder %s47, %s61
      %p63 = scmp.eq.s32.totalorder %s30, 0
      %p64 = por %p62, %p63
      %s65 = ssub.s32 %s31, %s43
      %p66 = scmp.eq.s32.totalorder %s65, 0
      %s68 = sadd.s32 %s67, 1
      %s69 = scalar_select %p66, %s67, %s68
      %p72 = pneg %p66
      %p73 = scmp.eq.s32.totalorder %s24, 1
      %p74 = por %p72, %p73
      %p75 = scmp.ne.s32.totalorder %s67, %s70
      %p76 = scmp.eq.s32.totalorder %s24, 0
      %p77 = por %p75, %p76
      %p78 = scmp.ne.s32.totalorder %s67, %s70
      %p79 = scmp.eq.s32.totalorder %s29, 1
      %p80 = por %p78, %p79
      %p81 = scmp.ne.s32.totalorder %s70, %s71
      %p82 = scmp.eq.s32.totalorder %s29, 0
      %p83 = por %p81, %p82
      %p84 = scmp.ne.s32.totalorder %s70, %s71
      %p85 = scmp.eq.s32.totalorder %s30, 1
      %p86 = por %p84, %p85
      %p88 = scmp.ne.s32.totalorder %s71, %s87
      %p89 = scmp.eq.s32.totalorder %s30, 0
      %p90 = por %p88, %p89
      %s92 = sadd.s32 %s91, 1
      %p95 = scmp.eq.s32.totalorder %s24, 1
      %p96 = scmp.ne.s32.totalorder %s91, %s93
      %p97 = scmp.eq.s32.totalorder %s24, 0
      %p98 = por %p96, %p97
      %p99 = scmp.ne.s32.totalorder %s91, %s93
      %p100 = scmp.eq.s32.totalorder %s29, 1
      %p101 = por %p99, %p100
      %p102 = scmp.ne.s32.totalorder %s93, %s94
      %p103 = scmp.eq.s32.totalorder %s29, 0
      %p104 = por %p102, %p103
      %p105 = scmp.ne.s32.totalorder %s93, %s94
      %p106 = scmp.eq.s32.totalorder %s30, 1
      %p107 = por %p105, %p106
      %p109 = scmp.ne.s32.totalorder %s94, %s108
      %p110 = scmp.eq.s32.totalorder %s30, 0
      %p111 = por %p109, %p110
      %s113 = sadd.s32 %s112, 1
      %p116 = scmp.eq.s32.totalorder %s24, 1
      %p117 = scmp.ne.s32.totalorder %s112, %s114
      %p118 = scmp.eq.s32.totalorder %s24, 0
      %p119 = por %p117, %p118
      %p120 = scmp.ne.s32.totalorder %s112, %s114
      %p121 = scmp.eq.s32.totalorder %s29, 1
      %p122 = por %p120, %p121
      %p123 = scmp.ne.s32.totalorder %s114, %s115
      %p124 = scmp.eq.s32.totalorder %s29, 0
      %p125 = por %p123, %p124
      %p126 = scmp.ne.s32.totalorder %s114, %s115
      %p127 = scmp.eq.s32.totalorder %s30, 1
      %p128 = por %p126, %p127
      %p130 = scmp.ne.s32.totalorder %s115, %s129
      %p131 = scmp.eq.s32.totalorder %s30, 0
      %p132 = por %p130, %p131
      %s133 = sadd.s32 %s32, %s31
      %s134 = sadd.s32 %s39, %s43
      %s135 = ssub.s32 %s133, %s134
      %p136 = scmp.eq.s32.totalorder %s135, 0
      %s138 = sadd.s32 %s137, 1
      %s139 = scalar_select %p136, %s137, %s138
      %p142 = pneg %p136
      %p143 = scmp.eq.s32.totalorder %s24, 1
      %p144 = por %p142, %p143
      %p145 = scmp.ne.s32.totalorder %s137, %s140
      %p146 = scmp.eq.s32.totalorder %s24, 0
      %p147 = por %p145, %p146
      %p148 = scmp.ne.s32.totalorder %s137, %s140
      %p149 = scmp.eq.s32.totalorder %s29, 1
      %p150 = por %p148, %p149
      %p151 = scmp.ne.s32.totalorder %s140, %s141
      %p152 = scmp.eq.s32.totalorder %s29, 0
      %p153 = por %p151, %p152
      %p154 = scmp.ne.s32.totalorder %s140, %s141
      %p155 = scmp.eq.s32.totalorder %s30, 1
      %p156 = por %p154, %p155
      %p158 = scmp.ne.s32.totalorder %s141, %s157
      %p159 = scmp.eq.s32.totalorder %s30, 0
      %p160 = por %p158, %p159
      %p161 = scmp.le.s32.totalorder 1, %s24
      %p162 = scmp.lt.s32.totalorder %s24, 3
      %p163 = pnand %p161, %p162
      %p164 = pneg %p163
      // Predicated region
      $region9: #{tpu_custom_call.1} parent=5 // pred_check
        _
      $region10: #{tpu_custom_call.1} parent=5 // pred_check_branch
        %166 = sbr.rel (%p163) target = $region12
      $region11: #{tpu_custom_call.1} parent=5 // pred_region
        %s167 = ssub.s32 %s24, 1
        // Predicated region
        $region13: #{tpu_custom_call.1} parent=11 // pred_check
          %p168 = pneg %p57
        $region14: #{tpu_custom_call.1} parent=11 // pred_check_branch
          %170 = sbr.rel (%p168) target = $region16
        $region15: #{tpu_custom_call.1} parent=11 // pred_region
          %172 = vsyncadd [#allocation6], 0
          %s173 = sshll.u32 %s1, 4
          %s174 = int_to_ptr.hbm [resolvable:$true] %s173
          %s175 = sshll.u32 [#allocation5], 4
          %s176 = int_to_ptr.vmem [resolvable:$true] %s175
          %181 = dma.hbm_to_vmem [thread:$0]  %s174, 512, %s176, [#allocation6], 128, 128, 8
        $region16: #{tpu_custom_call.1} parent=11 // pred_fallthru
          _
        // Predicated region
        $region17: #{tpu_custom_call.1} parent=11 // pred_check
          %p182 = pneg %p83
        $region18: #{tpu_custom_call.1} parent=11 // pred_check_branch
          %184 = sbr.rel (%p182) target = $region20
        $region19: #{tpu_custom_call.1} parent=11 // pred_region
          %186 = vsyncadd [#allocation9], 0
          %s187 = smul.addr %s33, 8
          %s188 = scalar_lea.hbm %s2, %s187
          %s190 = sshll.u32 %s188, 4
          %s191 = int_to_ptr.hbm [resolvable:$true] %s190
          %s192 = sshll.u32 [#allocation8], 4
          %s193 = int_to_ptr.vmem [resolvable:$true] %s192
          %195 = dma.hbm_to_vmem [thread:$0]  %s191, 128, %s193, [#allocation9]
        $region20: #{tpu_custom_call.1} parent=11 // pred_fallthru
          _
        // Predicated region
        $region21: #{tpu_custom_call.1} parent=11 // pred_check
          %p196 = pneg %p104
        $region22: #{tpu_custom_call.1} parent=11 // pred_check_branch
          %198 = sbr.rel (%p196) target = $region24
        $region23: #{tpu_custom_call.1} parent=11 // pred_region
          _
        $region24: #{tpu_custom_call.1} parent=11 // pred_fallthru
          _
        // Predicated region
        $region25: #{tpu_custom_call.1} parent=11 // pred_check
          %p199 = pneg %p125
        $region26: #{tpu_custom_call.1} parent=11 // pred_check_branch
          %201 = sbr.rel (%p199) target = $region28
        $region27: #{tpu_custom_call.1} parent=11 // pred_region
          _
        $region28: #{tpu_custom_call.1} parent=11 // pred_fallthru
          _
      $region12: #{tpu_custom_call.1} parent=5 // pred_fallthru
        _
      %p202 = scmp.lt.s32.totalorder %s24, 2
      // Predicated region
      $region29: #{tpu_custom_call.1} parent=5 // pred_check
        %p203 = pneg %p202
      $region30: #{tpu_custom_call.1} parent=5 // pred_check_branch
        %205 = sbr.rel (%p203) target = $region32
      $region31: #{tpu_custom_call.1} parent=5 // pred_region
        _
      $region32: #{tpu_custom_call.1} parent=5 // pred_fallthru
        _
      %p206 = scmp.le.s32.totalorder 1, %s24
      %p207 = scmp.lt.s32.totalorder %s24, 3
      %p208 = pnand %p206, %p207
      %p209 = pneg %p208
      // Predicated region
      $region33: #{tpu_custom_call.1} parent=5 // pred_check
        _
      $region34: #{tpu_custom_call.1} parent=5 // pred_check_branch
        %211 = sbr.rel (%p208) target = $region36
      $region35: #{tpu_custom_call.1} parent=5 // pred_region
        %s212 = ssub.s32 %s24, 1
        // Predicated region
        $region37: #{tpu_custom_call.1} parent=35 // pred_check
          %p213 = pneg %p57
        $region38: #{tpu_custom_call.1} parent=35 // pred_check_branch
          %215 = sbr.rel (%p213) target = $region40
        $region39: #{tpu_custom_call.1} parent=35 // pred_region
          %217 = dma.done [#allocation6], 512
        $region40: #{tpu_custom_call.1} parent=35 // pred_fallthru
          _
        // Predicated region
        $region41: #{tpu_custom_call.1} parent=35 // pred_check
          %p218 = pneg %p83
        $region42: #{tpu_custom_call.1} parent=35 // pred_check_branch
          %220 = sbr.rel (%p218) target = $region44
        $region43: #{tpu_custom_call.1} parent=35 // pred_region
          %222 = dma.done [#allocation9], 128
        $region44: #{tpu_custom_call.1} parent=35 // pred_fallthru
          _
        %p223 = pneg %p57
        %p224 = pneg %p54
        %p225 = pneg %p83
        %p226 = pneg %p80
        %p227 = pneg %p104
        %p228 = pneg %p101
        %p229 = pneg %p125
        %p230 = pneg %p122
        %p231 = pneg %p153
        %p232 = pneg %p150
        %s233 = sand.u32 %s140, 1
        %s234 = scalar_lea.sflag [#allocation7], %s233
        %s235 = sand.u32 %s140, 1
        %s236 = smul.addr %s235, 8
        %s237 = scalar_lea.vmem [#allocation10], %s236
        %s238 = sadd.s32 %s34, %s33
        %s239 = smul.u32 %s34, 8
        %s240 = smul.u32 %s33, 8
        %s241 = sadd.s32 %s239, %s240
        %s242 = sld [smem:[#allocation4 + %s241]]
        %p243 = scmp.gt.s32.totalorder %s242, 0
        %s244 = scalar_select %p243, %s242, 0
        %p245 = scmp.lt.s32.totalorder %s244, 31
        %s246 = scalar_select %p245, %s244, 31
        %s247 = scalar_lea.vmem [#allocation5], %s246
        %v248 = vld [vmem:[%s247] sm:$0x1]
        %vm249 = vcmask 253952
        %250 = vst.msk [vmem:[#allocation2] sm:$0x1] %vm249, %v248
        %s251 = sadd.s32 %s241, 1
        %s252 = sld [smem:[#allocation4 + %s251]]
        %p253 = scmp.gt.s32.totalorder %s252, 0
        %s254 = scalar_select %p253, %s252, 0
        %p255 = scmp.lt.s32.totalorder %s254, 31
        %s256 = scalar_select %p255, %s254, 31
        %s257 = scalar_lea.vmem [#allocation5], %s256
        %v258 = vld [vmem:[%s257] sm:$0x1]
        %259 = vst.msk [vmem:[#allocation2 + $0x1] sm:$0x1] %vm249, %v258
        %s260 = sadd.s32 %s241, 2
        %s261 = sld [smem:[#allocation4 + %s260]]
        %p262 = scmp.gt.s32.totalorder %s261, 0
        %s263 = scalar_select %p262, %s261, 0
        %p264 = scmp.lt.s32.totalorder %s263, 31
        %s265 = scalar_select %p264, %s263, 31
        %s266 = scalar_lea.vmem [#allocation5], %s265
        %v267 = vld [vmem:[%s266] sm:$0x1]
        %268 = vst.msk [vmem:[#allocation2 + $0x2] sm:$0x1] %vm249, %v267
        %s269 = sadd.s32 %s241, 3
        %s270 = sld [smem:[#allocation4 + %s269]]
        %p271 = scmp.gt.s32.totalorder %s270, 0
        %s272 = scalar_select %p271, %s270, 0
        %p273 = scmp.lt.s32.totalorder %s272, 31
        %s274 = scalar_select %p273, %s272, 31
        %s275 = scalar_lea.vmem [#allocation5], %s274
        %v276 = vld [vmem:[%s275] sm:$0x1]
        %277 = vst.msk [vmem:[#allocation2 + $0x3] sm:$0x1] %vm249, %v276
        %s278 = sadd.s32 %s241, 4
        %s279 = sld [smem:[#allocation4 + %s278]]
        %p280 = scmp.gt.s32.totalorder %s279, 0
        %s281 = scalar_select %p280, %s279, 0
        %p282 = scmp.lt.s32.totalorder %s281, 31
        %s283 = scalar_select %p282, %s281, 31
        %s284 = scalar_lea.vmem [#allocation5], %s283
        %v285 = vld [vmem:[%s284] sm:$0x1]
        %286 = vst.msk [vmem:[#allocation2 + $0x4] sm:$0x1] %vm249, %v285
        %s287 = sadd.s32 %s241, 5
        %s288 = sld [smem:[#allocation4 + %s287]]
        %p289 = scmp.gt.s32.totalorder %s288, 0
        %s290 = scalar_select %p289, %s288, 0
        %p291 = scmp.lt.s32.totalorder %s290, 31
        %s292 = scalar_select %p291, %s290, 31
        %s293 = scalar_lea.vmem [#allocation5], %s292
        %v294 = vld [vmem:[%s293] sm:$0x1]
        %295 = vst.msk [vmem:[#allocation2 + $0x5] sm:$0x1] %vm249, %v294
        %s296 = sadd.s32 %s241, 6
        %s297 = sld [smem:[#allocation4 + %s296]]
        %p298 = scmp.gt.s32.totalorder %s297, 0
        %s299 = scalar_select %p298, %s297, 0
        %p300 = scmp.lt.s32.totalorder %s299, 31
        %s301 = scalar_select %p300, %s299, 31
        %s302 = scalar_lea.vmem [#allocation5], %s301
        %v303 = vld [vmem:[%s302] sm:$0x1]
        %304 = vst.msk [vmem:[#allocation2 + $0x6] sm:$0x1] %vm249, %v303
        %s305 = sadd.s32 %s241, 7
        %s306 = sld [smem:[#allocation4 + %s305]]
        %p307 = scmp.gt.s32.totalorder %s306, 0
        %s308 = scalar_select %p307, %s306, 0
        %p309 = scmp.lt.s32.totalorder %s308, 31
        %s310 = scalar_select %p309, %s308, 31
        %s311 = scalar_lea.vmem [#allocation5], %s310
        %v312 = vld [vmem:[%s311] sm:$0x1]
        %313 = vst.msk [vmem:[#allocation2 + $0x7] sm:$0x1] %vm249, %v312
        %v314 = vld [vmem:[#allocation2] sm:$0xff]
        %v315 = vld [vmem:[#allocation8] sm:$0xff]
        %v316 = vadd.f32 %v314, %v315
        %v317 = vld [vmem:[%s3] sm:$0x1]
        %v318 = vld [vmem:[%s4] sm:$0x1]
        %vm319 = vcmask 261120
        %v320 = vsel %vm319, %v316, 0.0
        %321 = vadd.xlane.f32.xlu0 %v320
        %v322 = vpop.xlane.xlu0 %321
        %v323 = vrcp.pop 32.0
        %v324 = vmul.f32 32.0, %v323
        %v325 = vsub.f32 1.0, %v324
        %v326 = vmul.f32 %v323, %v325
        %v327 = vadd.f32 %v323, %v326
        %vm328 = vweird.f32 %v323
        %v329 = vsel %vm328, %v323, %v327
        %v330 = vmul.f32 %v322, %v329
        %v331 = vsub.f32 %v316, %v330
        %v332 = vmul.f32 %v331, %v331
        %v333 = vsel %vm319, %v332, 0.0
        %334 = vadd.xlane.f32.xlu0 %v333
        %v335 = vpop.xlane.xlu0 %334
        %v336 = vmul.f32 %v335, %v329
        %v337 = vadd.f32 %v336, 1e-05
        %v338 = vrsqrt.pop %v337
        %v339 = vmul.f32 %v338, %v337
        %v340 = vmul.f32 %v339, %v338
        %v341 = vmul.f32 0.5, %v340
        %v342 = vsub.f32 1.5, %v341
        %v343 = vmul.f32 %v338, %v342
        %vm344 = vweird.f32 %v337
        %vm345 = vweird.f32 %v338
        %vm346 = vmor %vm344, %vm345
        %v347 = vsel %vm346, %v338, %v343
        %v348 = vmul.f32 %v331, %v347
        %v350 = vperm.slane %v317, 0
        %v352 = vmul.f32 %v348, %v350
        %v354 = vperm.slane %v318, 0
        %v356 = vadd.f32 %v352, %v354
        %357 = vst.msk [vmem:[%s237] sm:$0xff] %vm319, %v356
        %s358 = sand.u32 %s140, 1
        %s359 = scalar_lea.sflag [#allocation7], %s358
        %s360 = sand.u32 %s140, 1
        %s361 = smul.addr %s360, 8
        %s362 = scalar_lea.vmem [#allocation10], %s361
        // Predicated region
        $region45: #{tpu_custom_call.1} parent=35 // pred_check
          %p363 = pneg %p150
        $region46: #{tpu_custom_call.1} parent=35 // pred_check_branch
          %365 = sbr.rel (%p363) target = $region48
        $region47: #{tpu_custom_call.1} parent=35 // pred_region
          %s366 = sadd.s32 %s34, %s33
          %368 = vsyncadd %s359, 0
          %s369 = smul.addr %s366, 8
          %s370 = scalar_lea.hbm %s5, %s369
          %s372 = sshll.u32 %s362, 4
          %s373 = int_to_ptr.vmem [resolvable:$true] %s372
          %s374 = sshll.u32 %s370, 4
          %s375 = int_to_ptr.hbm [resolvable:$true] %s374
          %377 = dma.vmem_to_hbm [thread:$0]  %s373, 128, %s375, %s359
        $region48: #{tpu_custom_call.1} parent=35 // pred_fallthru
          _
      $region36: #{tpu_custom_call.1} parent=5 // pred_fallthru
        _
      %p378 = scmp.le.s32.totalorder 2, %s24
      // Predicated region
      $region49: #{tpu_custom_call.1} parent=5 // pred_check
        %p379 = pneg %p378
      $region50: #{tpu_custom_call.1} parent=5 // pred_check_branch
        %381 = sbr.rel (%p379) target = $region52
      $region51: #{tpu_custom_call.1} parent=5 // pred_region
        %s382 = ssub.s32 %s24, 2
        // Predicated region
        $region53: #{tpu_custom_call.1} parent=51 // pred_check
          %p383 = pneg %p156
        $region54: #{tpu_custom_call.1} parent=51 // pred_check_branch
          %385 = sbr.rel (%p383) target = $region56
        $region55: #{tpu_custom_call.1} parent=51 // pred_region
          %s386 = sand.u32 %s141, 1
          %s387 = scalar_lea.sflag [#allocation7], %s386
          %s388 = sand.u32 %s141, 1
          %s389 = smul.addr %s388, 8
          %s390 = scalar_lea.vmem [#allocation10], %s389
          %392 = dma.done %s387, 128
        $region56: #{tpu_custom_call.1} parent=51 // pred_fallthru
          _
      $region52: #{tpu_custom_call.1} parent=5 // pred_fallthru
        _
    $region6: #{tpu_custom_call.1} parent=1 // loop_footer
      %s28 = sadd.s32 1, %s24
    $region7: #{tpu_custom_call.1} parent=1 // loop_footer_branch
      %23 = sbr.rel target = $region3
    $region8: #{tpu_custom_call.1} parent=1 // loop_exit
      _
    %393 = vsyncpa [#allocation6], 1
    %s394 = scalar_lea.sflag [#allocation6], 1
    %395 = vsyncpa %s394, 1
    %396 = vsyncpa [#allocation9], 1
    %397 = vsyncpa [#allocation7], 1
    %s398 = scalar_lea.sflag [#allocation7], 1
    %399 = vsyncpa %s398, 1

</llo_original>
